<compile_context>
chip_gen: v6e
topology: v6e:2x2x1
jax: 0.10.0
libtpu: 0.0.40
codegen_flags: <defaults>
</compile_context>

<pallas_src>
import jax
import jax.numpy as jnp
from jax import lax
from jax.experimental import pallas as pl
from jax.experimental.pallas import tpu as pltpu

N_IN = 12


def _round_up(v, m):
    return ((v + m - 1) // m) * m


def hnn_kernel(x_ref,
               w1_ref, b1_ref,
               w2_ref, b2_ref,
               w3_ref, b3_ref,
               w4_ref, b4_ref,
               w5_ref, b5_ref,
               w6_ref,
               o_ref):
    # x_ref: (TILE_B, 12) straight from HBM (no host-side transpose).
    # Layer 1 contracts dim 1 of W1 (H, 12) with dim 1 of the x block, i.e.
    # W1 @ x^T, producing (H, TILE_B); the in-kernel transpose/contraction sits
    # on the otherwise-idle MXU/XLU slots and is hidden under the EUP tanh work.
    x = x_ref[...]
    h = jnp.tanh(
        lax.dot_general(w1_ref[...], x,
                        dimension_numbers=(((1,), (1,)), ((), ())),
                        preferred_element_type=jnp.float32)
        + b1_ref[...])
    h = jnp.tanh(jnp.dot(w2_ref[...], h, preferred_element_type=jnp.float32)
                 + b2_ref[...])
    h = jnp.tanh(h)  # intentional: the module applies Tanh twice after Linear #2
    h = jnp.tanh(jnp.dot(w3_ref[...], h, preferred_element_type=jnp.float32)
                 + b3_ref[...])
    h = jnp.tanh(jnp.dot(w4_ref[...], h, preferred_element_type=jnp.float32)
                 + b4_ref[...])
    h = jnp.tanh(jnp.dot(w5_ref[...], h, preferred_element_type=jnp.float32)
                 + b5_ref[...])
    # Final Linear(H, 1, bias=None): VPU multiply + sublane (XLU) reduction ->
    # lane-dense (1, TILE_B) output row, stored with full (unmasked) vst.
    o_ref[...] = jnp.sum(h * w6_ref[...], axis=0, keepdims=True)


def _pick_tile(batch, max_tile):
    """Lane-aligned (multiple-of-128) batch tile.  Prefer >= 2 grid steps when
    that adds no padding, so the 'parallel' batch axis can be sharded across
    v7x's two TensorCores instead of leaving one idle."""
    b128 = _round_up(max(batch, 1), 128)
    max_tile = max(128, _round_up(max_tile, 128))
    tile = min(max_tile, b128)
    if tile == b128 and b128 > 128 and (b128 // 2) % 128 == 0:
        tile = b128 // 2
    return tile


def hnn_forward(x, params, *, tile_b=2048):
    """x: (B, 12) float32.  params: see init_params (PyTorch (out,in) layout).

    Returns (B, 1) float32, matching HNN.forward.
    """
    B = x.shape[0]
    H = params[0].shape[0]

    tile = _pick_tile(B, tile_b)
    b_pad = _round_up(B, tile)
    n_tiles = b_pad // tile

    # Only a (cheap) zero-pad along the batch dim when B is ragged; no transpose.
    x_p = x if b_pad == B else jnp.pad(x, ((0, b_pad - B), (0, 0)))

    # Input marches along the batch axis; weights/biases stay VMEM-resident.
    x_spec = pl.BlockSpec((tile, N_IN), lambda i: (i, 0))
    param_specs = [pl.BlockSpec(p.shape, lambda i: (0, 0)) for p in params]
    out_spec = pl.BlockSpec((1, tile), lambda i: (0, i))

    # Advisory cost hint: the kernel is EUP(tanh)-bound (6 tanh per hidden elem).
    flops_per_row = 2 * (N_IN * H) + 4 * 2 * H * H + 2 * H
    weight_bytes = sum(int(p.size) * 4 for p in params)
    cost = pl.CostEstimate(
        flops=int(b_pad * flops_per_row),
        transcendentals=int(6 * b_pad * H),
        bytes_accessed=int(4 * (b_pad * N_IN + b_pad) + weight_bytes),
    )

    out = pl.pallas_call(
        hnn_kernel,
        out_shape=jax.ShapeDtypeStruct((1, b_pad), jnp.float32),
        grid_spec=pltpu.PrefetchScalarGridSpec(
            num_scalar_prefetch=0,
            grid=(n_tiles,),
            in_specs=[x_spec] + param_specs,
            out_specs=out_spec,
        ),
        compiler_params=pltpu.CompilerParams(
            dimension_semantics=("parallel",),      # v7x: batch tiles over 2 TCs
            vmem_limit_bytes=32 * 1024 * 1024,      # headroom for large tile_b
        ),
        cost_estimate=cost,
    )(x_p, *params)

    return out[:, :B].T  # (B, 1)


def init_params(key, n_hidden):
    """Weights ~ Normal(0, 0.1) in PyTorch (out_features, in_features) layout,
    matching nn.init.normal_(m.weight, std=0.1).  Biases are (out, 1); the
    module leaves them at PyTorch's default uniform init, approximated here
    with a deterministic uniform.  Final Linear has bias=None; its weight is
    stored transposed as (H, 1) for the in-kernel reduction."""
    dims = [(n_hidden, N_IN)] + [(n_hidden, n_hidden)] * 4 + [(1, n_hidden)]
    params = []
    keys = jax.random.split(key, 2 * len(dims))
    for i, (dout, din) in enumerate(dims):
        w = 0.1 * jax.random.normal(keys[2 * i], (dout, din), dtype=jnp.float32)
        if i < len(dims) - 1:
            params.append(w)
            bound = 1.0 / jnp.sqrt(jnp.float32(din))
            b = jax.random.uniform(keys[2 * i + 1], (dout, 1),
                                   minval=-bound, maxval=bound,
                                   dtype=jnp.float32)
            params.append(b)
        else:
            params.append(w.T)  # (H, 1): final layer weight column, no bias
    return params


def hnn_reference(x, params):
    """Pure-JAX reference in standard (B, features) layout."""
    w1, b1, w2, b2, w3, b3, w4, b4, w5, b5, w6 = params
    h = jnp.tanh(x @ w1.T + b1[:, 0])
    h = jnp.tanh(h @ w2.T + b2[:, 0])
    h = jnp.tanh(h)
    h = jnp.tanh(h @ w3.T + b3[:, 0])
    h = jnp.tanh(h @ w4.T + b4[:, 0])
    h = jnp.tanh(h @ w5.T + b5[:, 0])
    return h @ w6


# TODO(synk): HNN.derivative / HNN.sympletic need dF/dx; compose jax.grad over
# hnn_forward (or a custom backward kernel) outside this forward-pass kernel.


if __name__ == "__main__":
    key = jax.random.PRNGKey(0)
    k_x, k_p, k_x2 = jax.random.split(key, 3)

    H = 32
    params = init_params(k_p, H)

    # Small canonical test (single 128-lane tile).
    B = 8
    x = jax.random.normal(k_x, (B, N_IN), dtype=jnp.float32)
    out = jax.block_until_ready(hnn_forward(x, params))
    ref = hnn_reference(x, params)
    assert out.shape == (B, 1)
    assert jnp.allclose(out, ref, atol=1e-5, rtol=1e-5)

    # Ragged batch exercising zero-padding and the >=2-tile (v7x) path.
    B2 = 250
    x2 = jax.random.normal(k_x2, (B2, N_IN), dtype=jnp.float32)
    out2 = jax.block_until_ready(hnn_forward(x2, params))
    ref2 = hnn_reference(x2, params)
    assert out2.shape == (B2, 1)
    assert jnp.allclose(out2, ref2, atol=1e-5, rtol=1e-5)

    print("KERNEL_OK")
</pallas_src>

<mosaic_0001>
module attributes {stable_mosaic.version = 11 : i64} {
  func.func @hnn_kernel(%arg0: i32, %arg1: memref<128x12xf32, #tpu.memory_space<vmem>>, %arg2: memref<32x12xf32, #tpu.memory_space<vmem>>, %arg3: memref<32x1xf32, #tpu.memory_space<vmem>>, %arg4: memref<32x32xf32, #tpu.memory_space<vmem>>, %arg5: memref<32x1xf32, #tpu.memory_space<vmem>>, %arg6: memref<32x32xf32, #tpu.memory_space<vmem>>, %arg7: memref<32x1xf32, #tpu.memory_space<vmem>>, %arg8: memref<32x32xf32, #tpu.memory_space<vmem>>, %arg9: memref<32x1xf32, #tpu.memory_space<vmem>>, %arg10: memref<32x32xf32, #tpu.memory_space<vmem>>, %arg11: memref<32x1xf32, #tpu.memory_space<vmem>>, %arg12: memref<32x1xf32, #tpu.memory_space<vmem>>, %arg13: memref<1x128xf32, #tpu.memory_space<vmem>>) attributes {dimension_semantics = [#tpu.dimension_semantics<parallel>], iteration_bounds = array<i64: 1>, scalar_prefetch = 0 : i64, scratch_operands = 0 : i64, tpu.core_type = #tpu.core_type<tc>, window_params = [{transform_indices = @transform_0, window_bounds = array<i64: 128, 12>}, {pipeline_mode = #tpu.pipeline_mode<synchronous>, transform_indices = @transform_1, window_bounds = array<i64: 32, 12>}, {pipeline_mode = #tpu.pipeline_mode<synchronous>, transform_indices = @transform_2, window_bounds = array<i64: 32, 1>}, {pipeline_mode = #tpu.pipeline_mode<synchronous>, transform_indices = @transform_3, window_bounds = array<i64: 32, 32>}, {pipeline_mode = #tpu.pipeline_mode<synchronous>, transform_indices = @transform_4, window_bounds = array<i64: 32, 1>}, {pipeline_mode = #tpu.pipeline_mode<synchronous>, transform_indices = @transform_5, window_bounds = array<i64: 32, 32>}, {pipeline_mode = #tpu.pipeline_mode<synchronous>, transform_indices = @transform_6, window_bounds = array<i64: 32, 1>}, {pipeline_mode = #tpu.pipeline_mode<synchronous>, transform_indices = @transform_7, window_bounds = array<i64: 32, 32>}, {pipeline_mode = #tpu.pipeline_mode<synchronous>, transform_indices = @transform_8, window_bounds = array<i64: 32, 1>}, {pipeline_mode = #tpu.pipeline_mode<synchronous>, transform_indices = @transform_9, window_bounds = array<i64: 32, 32>}, {pipeline_mode = #tpu.pipeline_mode<synchronous>, transform_indices = @transform_10, window_bounds = array<i64: 32, 1>}, {pipeline_mode = #tpu.pipeline_mode<synchronous>, transform_indices = @transform_11, window_bounds = array<i64: 32, 1>}, {transform_indices = @transform_12, window_bounds = array<i64: 1, 128>}]} {
    %c0 = arith.constant 0 : index
    %c0_0 = arith.constant 0 : index
    %0 = vector.load %arg1[%c0, %c0_0] : memref<128x12xf32, #tpu.memory_space<vmem>>, vector<128x12xf32>
    %c0_1 = arith.constant 0 : index
    %c0_2 = arith.constant 0 : index
    %1 = vector.load %arg2[%c0_1, %c0_2] : memref<32x12xf32, #tpu.memory_space<vmem>>, vector<32x12xf32>
    %cst = arith.constant dense<0.000000e+00> : vector<32x128xf32>
    %2 = tpu.matmul %1, %0, %cst {dimension_numbers = #tpu.dot_dimension_numbers<[1], [1], [0], [0], [0, 0, 1, 0], [], []>} : vector<32x12xf32>, vector<128x12xf32>, vector<32x128xf32> -> vector<32x128xf32>
    %c0_3 = arith.constant 0 : index
    %c0_4 = arith.constant 0 : index
    %3 = vector.load %arg3[%c0_3, %c0_4] : memref<32x1xf32, #tpu.memory_space<vmem>>, vector<32x1xf32>
    %4 = vector.broadcast %3 : vector<32x1xf32> to vector<32x128xf32>
    %5 = arith.addf %2, %4 : vector<32x128xf32>
    %6 = math.tanh %5 : vector<32x128xf32>
    %c0_5 = arith.constant 0 : index
    %c0_6 = arith.constant 0 : index
    %7 = vector.load %arg4[%c0_5, %c0_6] : memref<32x32xf32, #tpu.memory_space<vmem>>, vector<32x32xf32>
    %cst_7 = arith.constant dense<0.000000e+00> : vector<32x128xf32>
    %8 = tpu.matmul %7, %6, %cst_7 {dimension_numbers = #tpu.dot_dimension_numbers<[1], [0], [0], [1], [0, 0, 1, 1], [], []>} : vector<32x32xf32>, vector<32x128xf32>, vector<32x128xf32> -> vector<32x128xf32>
    %c0_8 = arith.constant 0 : index
    %c0_9 = arith.constant 0 : index
    %9 = vector.load %arg5[%c0_8, %c0_9] : memref<32x1xf32, #tpu.memory_space<vmem>>, vector<32x1xf32>
    %10 = vector.broadcast %9 : vector<32x1xf32> to vector<32x128xf32>
    %11 = arith.addf %8, %10 : vector<32x128xf32>
    %12 = math.tanh %11 : vector<32x128xf32>
    %13 = math.tanh %12 : vector<32x128xf32>
    %c0_10 = arith.constant 0 : index
    %c0_11 = arith.constant 0 : index
    %14 = vector.load %arg6[%c0_10, %c0_11] : memref<32x32xf32, #tpu.memory_space<vmem>>, vector<32x32xf32>
    %cst_12 = arith.constant dense<0.000000e+00> : vector<32x128xf32>
    %15 = tpu.matmul %14, %13, %cst_12 {dimension_numbers = #tpu.dot_dimension_numbers<[1], [0], [0], [1], [0, 0, 1, 1], [], []>} : vector<32x32xf32>, vector<32x128xf32>, vector<32x128xf32> -> vector<32x128xf32>
    %c0_13 = arith.constant 0 : index
    %c0_14 = arith.constant 0 : index
    %16 = vector.load %arg7[%c0_13, %c0_14] : memref<32x1xf32, #tpu.memory_space<vmem>>, vector<32x1xf32>
    %17 = vector.broadcast %16 : vector<32x1xf32> to vector<32x128xf32>
    %18 = arith.addf %15, %17 : vector<32x128xf32>
    %19 = math.tanh %18 : vector<32x128xf32>
    %c0_15 = arith.constant 0 : index
    %c0_16 = arith.constant 0 : index
    %20 = vector.load %arg8[%c0_15, %c0_16] : memref<32x32xf32, #tpu.memory_space<vmem>>, vector<32x32xf32>
    %cst_17 = arith.constant dense<0.000000e+00> : vector<32x128xf32>
    %21 = tpu.matmul %20, %19, %cst_17 {dimension_numbers = #tpu.dot_dimension_numbers<[1], [0], [0], [1], [0, 0, 1, 1], [], []>} : vector<32x32xf32>, vector<32x128xf32>, vector<32x128xf32> -> vector<32x128xf32>
    %c0_18 = arith.constant 0 : index
    %c0_19 = arith.constant 0 : index
    %22 = vector.load %arg9[%c0_18, %c0_19] : memref<32x1xf32, #tpu.memory_space<vmem>>, vector<32x1xf32>
    %23 = vector.broadcast %22 : vector<32x1xf32> to vector<32x128xf32>
    %24 = arith.addf %21, %23 : vector<32x128xf32>
    %25 = math.tanh %24 : vector<32x128xf32>
    %c0_20 = arith.constant 0 : index
    %c0_21 = arith.constant 0 : index
    %26 = vector.load %arg10[%c0_20, %c0_21] : memref<32x32xf32, #tpu.memory_space<vmem>>, vector<32x32xf32>
    %cst_22 = arith.constant dense<0.000000e+00> : vector<32x128xf32>
    %27 = tpu.matmul %26, %25, %cst_22 {dimension_numbers = #tpu.dot_dimension_numbers<[1], [0], [0], [1], [0, 0, 1, 1], [], []>} : vector<32x32xf32>, vector<32x128xf32>, vector<32x128xf32> -> vector<32x128xf32>
    %c0_23 = arith.constant 0 : index
    %c0_24 = arith.constant 0 : index
    %28 = vector.load %arg11[%c0_23, %c0_24] : memref<32x1xf32, #tpu.memory_space<vmem>>, vector<32x1xf32>
    %29 = vector.broadcast %28 : vector<32x1xf32> to vector<32x128xf32>
    %30 = arith.addf %27, %29 : vector<32x128xf32>
    %31 = math.tanh %30 : vector<32x128xf32>
    %c0_25 = arith.constant 0 : index
    %c0_26 = arith.constant 0 : index
    %32 = vector.load %arg12[%c0_25, %c0_26] : memref<32x1xf32, #tpu.memory_space<vmem>>, vector<32x1xf32>
    %33 = vector.broadcast %32 : vector<32x1xf32> to vector<32x128xf32>
    %34 = arith.mulf %31, %33 : vector<32x128xf32>
    %cst_27 = arith.constant dense<0.000000e+00> : vector<128xf32>
    %35 = vector.multi_reduction <add>, %34, %cst_27 [0] : vector<32x128xf32> to vector<128xf32>
    %36 = vector.shape_cast %35 : vector<128xf32> to vector<1x128xf32>
    %c0_28 = arith.constant 0 : index
    %c0_29 = arith.constant 0 : index
    %37 = vector.load %arg13[%c0_28, %c0_29] : memref<1x128xf32, #tpu.memory_space<vmem>>, vector<1x128xf32>
    tpu.vector_store %arg13[%c0_28, %c0_29], %36 {strides = array<i32>} : memref<1x128xf32, #tpu.memory_space<vmem>>, vector<1x128xf32>,
    return
  }
  func.func @transform_0(%arg0: i32) -> (i32, i32) {
    %c0_i32 = arith.constant 0 : i32
    %c0_i32_0 = arith.constant 0 : i32
    return %arg0, %c0_i32 : i32, i32
  }
  func.func @transform_1(%arg0: i32) -> (i32, i32) {
    %c0_i32 = arith.constant 0 : i32
    %c0_i32_0 = arith.constant 0 : i32
    %c0_i32_1 = arith.constant 0 : i32
    return %c0_i32, %c0_i32_0 : i32, i32
  }
  func.func @transform_2(%arg0: i32) -> (i32, i32) {
    %c0_i32 = arith.constant 0 : i32
    %c0_i32_0 = arith.constant 0 : i32
    %c0_i32_1 = arith.constant 0 : i32
    return %c0_i32, %c0_i32_0 : i32, i32
  }
  func.func @transform_3(%arg0: i32) -> (i32, i32) {
    %c0_i32 = arith.constant 0 : i32
    %c0_i32_0 = arith.constant 0 : i32
    %c0_i32_1 = arith.constant 0 : i32
    return %c0_i32, %c0_i32_0 : i32, i32
  }
  func.func @transform_4(%arg0: i32) -> (i32, i32) {
    %c0_i32 = arith.constant 0 : i32
    %c0_i32_0 = arith.constant 0 : i32
    %c0_i32_1 = arith.constant 0 : i32
    return %c0_i32, %c0_i32_0 : i32, i32
  }
  func.func @transform_5(%arg0: i32) -> (i32, i32) {
    %c0_i32 = arith.constant 0 : i32
    %c0_i32_0 = arith.constant 0 : i32
    %c0_i32_1 = arith.constant 0 : i32
    return %c0_i32, %c0_i32_0 : i32, i32
  }
  func.func @transform_6(%arg0: i32) -> (i32, i32) {
    %c0_i32 = arith.constant 0 : i32
    %c0_i32_0 = arith.constant 0 : i32
    %c0_i32_1 = arith.constant 0 : i32
    return %c0_i32, %c0_i32_0 : i32, i32
  }
  func.func @transform_7(%arg0: i32) -> (i32, i32) {
    %c0_i32 = arith.constant 0 : i32
    %c0_i32_0 = arith.constant 0 : i32
    %c0_i32_1 = arith.constant 0 : i32
    return %c0_i32, %c0_i32_0 : i32, i32
  }
  func.func @transform_8(%arg0: i32) -> (i32, i32) {
    %c0_i32 = arith.constant 0 : i32
    %c0_i32_0 = arith.constant 0 : i32
    %c0_i32_1 = arith.constant 0 : i32
    return %c0_i32, %c0_i32_0 : i32, i32
  }
  func.func @transform_9(%arg0: i32) -> (i32, i32) {
    %c0_i32 = arith.constant 0 : i32
    %c0_i32_0 = arith.constant 0 : i32
    %c0_i32_1 = arith.constant 0 : i32
    return %c0_i32, %c0_i32_0 : i32, i32
  }
  func.func @transform_10(%arg0: i32) -> (i32, i32) {
    %c0_i32 = arith.constant 0 : i32
    %c0_i32_0 = arith.constant 0 : i32
    %c0_i32_1 = arith.constant 0 : i32
    return %c0_i32, %c0_i32_0 : i32, i32
  }
  func.func @transform_11(%arg0: i32) -> (i32, i32) {
    %c0_i32 = arith.constant 0 : i32
    %c0_i32_0 = arith.constant 0 : i32
    %c0_i32_1 = arith.constant 0 : i32
    return %c0_i32, %c0_i32_0 : i32, i32
  }
  func.func @transform_12(%arg0: i32) -> (i32, i32) {
    %c0_i32 = arith.constant 0 : i32
    %c0_i32_0 = arith.constant 0 : i32
    return %c0_i32, %arg0 : i32, i32
  }
}

</mosaic_0001>

<llo_original>
// kernel: tpu_custom_call.1
$region0: #{tpu_custom_call.1}
  #allocation0 [shape = 'u32[]', space=smem, size = 0x4, offset = 0x4, fixed_abs, tag = 'smem constant byte address 0x4 - core index']
  #allocation1 [shape = 'u32[144,128]{1,0:T(1,128)}', space=vmem, size = 0x12000, scoped, tag = 'internal scratch']
  %s0 = inlined_call_operand.vmem [shape: f32[128,12], index: 0, kind: input, shape index: {}]
  %s1 = inlined_call_operand.vmem [shape: f32[32,12], index: 1, kind: input, shape index: {}]
  %s2 = inlined_call_operand.vmem [shape: f32[32,1], index: 2, kind: input, shape index: {}]
  %s3 = inlined_call_operand.vmem [shape: f32[32,32], index: 3, kind: input, shape index: {}]
  %s4 = inlined_call_operand.vmem [shape: f32[32,1], index: 4, kind: input, shape index: {}]
  %s5 = inlined_call_operand.vmem [shape: f32[32,32], index: 5, kind: input, shape index: {}]
  %s6 = inlined_call_operand.vmem [shape: f32[32,1], index: 6, kind: input, shape index: {}]
  %s7 = inlined_call_operand.vmem [shape: f32[32,32], index: 7, kind: input, shape index: {}]
  %s8 = inlined_call_operand.vmem [shape: f32[32,1], index: 8, kind: input, shape index: {}]
  %s9 = inlined_call_operand.vmem [shape: f32[32,32], index: 9, kind: input, shape index: {}]
  %s10 = inlined_call_operand.vmem [shape: f32[32,1], index: 10, kind: input, shape index: {}]
  %s11 = inlined_call_operand.vmem [shape: f32[32,1], index: 11, kind: input, shape index: {}]
  %s12 = inlined_call_operand.hbm [shape: f32[1,128], index: 12, kind: output, shape index: {}]
  %s13 = sld [smem:[#allocation0]]
  $region58: #{tpu_custom_call.1} parent=0
    _
  %s15 = ssub.s32 1, %s13
  %s16 = scalar_select 0, %s15, %s13
  $region1: #{tpu_custom_call.1} parent=0
    #allocation2 [shape = 'u8[512]{0}', space=vmem, size = 0x400, scoped, tag = 'output window, operand 0, single buffered']
    #allocation3 [shape = 's32[1]{0}', space=sflag, size = 0x4, scoped, tag = 'scoped memory for tpu_custom_call.1']
    %17 = vsyncpa [#allocation3], 0
    // Predicated region
    $region2: #{tpu_custom_call.1} parent=1 // pred_check
      _
    $region3: #{tpu_custom_call.1} parent=1 // pred_check_branch
      %19 = sbr.rel (0) target = $region5
    $region4: #{tpu_custom_call.1} parent=1 // pred_region
      _
    $region5: #{tpu_custom_call.1} parent=1 // pred_fallthru
      _
    // Predicated region
    $region6: #{tpu_custom_call.1} parent=1 // pred_check
      _
    $region7: #{tpu_custom_call.1} parent=1 // pred_check_branch
      %21 = sbr.rel (0) target = $region9
    $region8: #{tpu_custom_call.1} parent=1 // pred_region
      _
    $region9: #{tpu_custom_call.1} parent=1 // pred_fallthru
      _
    // Predicated region
    $region10: #{tpu_custom_call.1} parent=1 // pred_check
      _
    $region11: #{tpu_custom_call.1} parent=1 // pred_check_branch
      %23 = sbr.rel (0) target = $region13
    $region12: #{tpu_custom_call.1} parent=1 // pred_region
      _
    $region13: #{tpu_custom_call.1} parent=1 // pred_fallthru
      _
    // Predicated region
    $region14: #{tpu_custom_call.1} parent=1 // pred_check
      _
    $region15: #{tpu_custom_call.1} parent=1 // pred_check_branch
      %25 = sbr.rel (0) target = $region17
    $region16: #{tpu_custom_call.1} parent=1 // pred_region
      _
    $region17: #{tpu_custom_call.1} parent=1 // pred_fallthru
      _
    // Predicated region
    $region18: #{tpu_custom_call.1} parent=1 // pred_check
      _
    $region19: #{tpu_custom_call.1} parent=1 // pred_check_branch
      %27 = sbr.rel (0) target = $region21
    $region20: #{tpu_custom_call.1} parent=1 // pred_region
      _
    $region21: #{tpu_custom_call.1} parent=1 // pred_fallthru
      _
    // Predicated region
    $region22: #{tpu_custom_call.1} parent=1 // pred_check
      _
    $region23: #{tpu_custom_call.1} parent=1 // pred_check_branch
      %29 = sbr.rel (0) target = $region25
    $region24: #{tpu_custom_call.1} parent=1 // pred_region
      _
    $region25: #{tpu_custom_call.1} parent=1 // pred_fallthru
      _
    // Predicated region
    $region26: #{tpu_custom_call.1} parent=1 // pred_check
      _
    $region27: #{tpu_custom_call.1} parent=1 // pred_check_branch
      %31 = sbr.rel (0) target = $region29
    $region28: #{tpu_custom_call.1} parent=1 // pred_region
      _
    $region29: #{tpu_custom_call.1} parent=1 // pred_fallthru
      _
    // Predicated region
    $region30: #{tpu_custom_call.1} parent=1 // pred_check
      _
    $region31: #{tpu_custom_call.1} parent=1 // pred_check_branch
      %33 = sbr.rel (0) target = $region33
    $region32: #{tpu_custom_call.1} parent=1 // pred_region
      _
    $region33: #{tpu_custom_call.1} parent=1 // pred_fallthru
      _
    // Predicated region
    $region34: #{tpu_custom_call.1} parent=1 // pred_check
      _
    $region35: #{tpu_custom_call.1} parent=1 // pred_check_branch
      %35 = sbr.rel (0) target = $region37
    $region36: #{tpu_custom_call.1} parent=1 // pred_region
      _
    $region37: #{tpu_custom_call.1} parent=1 // pred_fallthru
      _
    // Predicated region
    $region38: #{tpu_custom_call.1} parent=1 // pred_check
      _
    $region39: #{tpu_custom_call.1} parent=1 // pred_check_branch
      %37 = sbr.rel (0) target = $region41
    $region40: #{tpu_custom_call.1} parent=1 // pred_region
      _
    $region41: #{tpu_custom_call.1} parent=1 // pred_fallthru
      _
    // Predicated region
    $region42: #{tpu_custom_call.1} parent=1 // pred_check
      _
    $region43: #{tpu_custom_call.1} parent=1 // pred_check_branch
      %39 = sbr.rel (0) target = $region45
    $region44: #{tpu_custom_call.1} parent=1 // pred_region
      _
    $region45: #{tpu_custom_call.1} parent=1 // pred_fallthru
      _
    // Predicated region
    $region46: #{tpu_custom_call.1} parent=1 // pred_check
      _
    $region47: #{tpu_custom_call.1} parent=1 // pred_check_branch
      %41 = sbr.rel (0) target = $region49
    $region48: #{tpu_custom_call.1} parent=1 // pred_region
      _
    $region49: #{tpu_custom_call.1} parent=1 // pred_fallthru
      _
    %v42 = vld [vmem:[%s0] sm:$0xff]
    %v43 = vld [vmem:[%s0 + $0x8] sm:$0xff]
    %v44 = vld [vmem:[%s0 + $0x10] sm:$0xff]
    %v45 = vld [vmem:[%s0 + $0x18] sm:$0xff]
    %v46 = vld [vmem:[%s0 + $0x20] sm:$0xff]
    %v47 = vld [vmem:[%s0 + $0x28] sm:$0xff]
    %v48 = vld [vmem:[%s0 + $0x30] sm:$0xff]
    %v49 = vld [vmem:[%s0 + $0x38] sm:$0xff]
    %v50 = vld [vmem:[%s0 + $0x40] sm:$0xff]
    %v51 = vld [vmem:[%s0 + $0x48] sm:$0xff]
    %v52 = vld [vmem:[%s0 + $0x50] sm:$0xff]
    %v53 = vld [vmem:[%s0 + $0x58] sm:$0xff]
    %v54 = vld [vmem:[%s0 + $0x60] sm:$0xff]
    %v55 = vld [vmem:[%s0 + $0x68] sm:$0xff]
    %v56 = vld [vmem:[%s0 + $0x70] sm:$0xff]
    %v57 = vld [vmem:[%s0 + $0x78] sm:$0xff]
    %v58 = vld [vmem:[%s1] sm:$0xff]
    %v59 = vld [vmem:[%s1 + $0x8] sm:$0xff]
    %v60 = vld [vmem:[%s1 + $0x10] sm:$0xff]
    %v61 = vld [vmem:[%s1 + $0x18] sm:$0xff]
    %v62 = vld [vmem:[%s2] sm:$0xff]
    %v63 = vld [vmem:[%s2 + $0x8] sm:$0xff]
    %v64 = vld [vmem:[%s2 + $0x10] sm:$0xff]
    %v65 = vld [vmem:[%s2 + $0x18] sm:$0xff]
    %67 = vset.pattern.permute.xlu0 0
    %68 = vperm.xlu0 %67, %v62
    %v69 = vpop.permute.xlu0 %68
    %72 = vset.pattern.permute.xlu0 0
    %73 = vperm.xlu0 %72, %v63
    %v74 = vpop.permute.xlu0 %73
    %77 = vset.pattern.permute.xlu0 0
    %78 = vperm.xlu0 %77, %v64
    %v79 = vpop.permute.xlu0 %78
    %82 = vset.pattern.permute.xlu0 0
    %83 = vperm.xlu0 %82, %v65
    %v84 = vpop.permute.xlu0 %83
    %vm86 = vcmask 97280
    %v88 = vsel %vm86, %v58, 0
    %v91 = vsel %vm86, %v59, 0
    %v94 = vsel %vm86, %v60, 0
    %v97 = vsel %vm86, %v61, 0
    %v100 = vsel %vm86, %v42, 0
    %v103 = vsel %vm86, %v43, 0
    %v106 = vsel %vm86, %v44, 0
    %v109 = vsel %vm86, %v45, 0
    %v112 = vsel %vm86, %v46, 0
    %v115 = vsel %vm86, %v47, 0
    %v118 = vsel %vm86, %v48, 0
    %v121 = vsel %vm86, %v49, 0
    %v124 = vsel %vm86, %v50, 0
    %v127 = vsel %vm86, %v51, 0
    %v130 = vsel %vm86, %v52, 0
    %v133 = vsel %vm86, %v53, 0
    %v136 = vsel %vm86, %v54, 0
    %v139 = vsel %vm86, %v55, 0
    %v142 = vsel %vm86, %v56, 0
    %v145 = vsel %vm86, %v57, 0
    %147 = vmatprep.subr.mxu0 0.0
    %148 = vmatpush1.xpose.msra.mxu0 %v145
    %149 = vmatprep.subr.mxu0 0.0
    %150 = vmatpush1.xpose.msra.mxu0 %v142
    %151 = vmatprep.subr.mxu0 0.0
    %152 = vmatpush1.xpose.msra.mxu0 %v139
    %153 = vmatprep.subr.mxu0 0.0
    %154 = vmatpush1.xpose.msra.mxu0 %v136
    %155 = vmatprep.subr.mxu0 0.0
    %156 = vmatpush1.xpose.msra.mxu0 %v133
    %157 = vmatprep.subr.mxu0 0.0
    %158 = vmatpush1.xpose.msra.mxu0 %v130
    %159 = vmatprep.subr.mxu0 0.0
    %160 = vmatpush1.xpose.msra.mxu0 %v127
    %161 = vmatprep.subr.mxu0 0.0
    %162 = vmatpush1.xpose.msra.mxu0 %v124
    %163 = vmatprep.subr.mxu0 0.0
    %164 = vmatpush1.xpose.msra.mxu0 %v121
    %165 = vmatprep.subr.mxu0 0.0
    %166 = vmatpush1.xpose.msra.mxu0 %v118
    %167 = vmatprep.subr.mxu0 0.0
    %168 = vmatpush1.xpose.msra.mxu0 %v115
    %169 = vmatprep.subr.mxu0 0.0
    %170 = vmatpush1.xpose.msra.mxu0 %v112
    %171 = vmatprep.subr.mxu0 0.0
    %172 = vmatpush1.xpose.msra.mxu0 %v109
    %173 = vmatprep.subr.mxu0 0.0
    %174 = vmatpush1.xpose.msra.mxu0 %v106
    %175 = vmatprep.subr.mxu0 0.0
    %176 = vmatpush1.xpose.msra.mxu0 %v103
    %177 = vmatprep.subr.mxu0 0.0
    %178 = vmatpush1.xpose.msra.mxu0 %v100
    %179 = vmatprep.subr.mxu0 0.0
    %180 = vmatpush2.xpose.msra.mxu0 0.0
    %181 = vmatprep.subr.mxu0 0.0
    %182 = vmatpush2.xpose.msra.mxu0 0.0
    %183 = vmatprep.subr.mxu0 0.0
    %184 = vmatpush2.xpose.msra.mxu0 0.0
    %185 = vmatprep.subr.mxu0 0.0
    %186 = vmatpush2.xpose.msra.mxu0 0.0
    %187 = vmatprep.subr.mxu0 0.0
    %188 = vmatpush2.xpose.msra.mxu0 0.0
    %189 = vmatprep.subr.mxu0 0.0
    %190 = vmatpush2.xpose.msra.mxu0 0.0
    %191 = vmatprep.subr.mxu0 0.0
    %192 = vmatpush2.xpose.msra.mxu0 0.0
    %193 = vmatprep.subr.mxu0 0.0
    %194 = vmatpush2.xpose.msra.mxu0 0.0
    %195 = vmatprep.subr.mxu0 0.0
    %196 = vmatpush2.xpose.msra.mxu0 0.0
    %197 = vmatprep.subr.mxu0 0.0
    %198 = vmatpush2.xpose.msra.mxu0 0.0
    %199 = vmatprep.subr.mxu0 0.0
    %200 = vmatpush2.xpose.msra.mxu0 0.0
    %201 = vmatprep.subr.mxu0 0.0
    %202 = vmatpush2.xpose.msra.mxu0 0.0
    %203 = vmatprep.subr.mxu0 0.0
    %204 = vmatpush2.xpose.msra.mxu0 0.0
    %205 = vmatprep.subr.mxu0 0.0
    %206 = vmatpush2.xpose.msra.mxu0 0.0
    %207 = vmatprep.subr.mxu0 0.0
    %208 = vmatpush2.xpose.msra.mxu0 0.0
    %209 = vmatprep.subr.mxu0 0.0
    %210 = vmatpush2.xpose.msra.mxu0 0.0
    %211 = vmatprep.mubr.f32.mxu0 0.0
    %212 = vmatmul.mubr.f32.gmra.mxu0 %v88
    %v213 = vpop.f32.mrf.mxu0
    %v214 = vadd.f32 %v69, %v213
    %v215 = vpop.f32.mrf.mxu0
    %216 = vmatprep.mubr.f32.mxu0 0.0
    %217 = vmatmul.mubr.f32.gmra.mxu0 %v91
    %v218 = vpop.f32.mrf.mxu0
    %v219 = vadd.f32 %v74, %v218
    %v220 = vpop.f32.mrf.mxu0
    %221 = vmatprep.mubr.f32.mxu0 0.0
    %222 = vmatmul.mubr.f32.gmra.mxu0 %v94
    %v223 = vpop.f32.mrf.mxu0
    %v224 = vadd.f32 %v79, %v223
    %v225 = vpop.f32.mrf.mxu0
    %226 = vmatprep.mubr.f32.mxu0 0.0
    %227 = vmatmul.mubr.f32.gmra.mxu0 %v97
    %v228 = vpop.f32.mrf.mxu0
    %v229 = vadd.f32 %v84, %v228
    %v230 = vpop.f32.mrf.mxu0
    %231 = vdwg.mxu0
    %v232 = vtanh.pop %v214
    %v233 = vtanh.pop %v219
    %v234 = vtanh.pop %v224
    %v235 = vtanh.pop %v229
    %v236 = vld [vmem:[%s3] sm:$0xff]
    %v237 = vld [vmem:[%s3 + $0x8] sm:$0xff]
    %v238 = vld [vmem:[%s3 + $0x10] sm:$0xff]
    %v239 = vld [vmem:[%s3 + $0x18] sm:$0xff]
    %v240 = vld [vmem:[%s4] sm:$0xff]
    %v241 = vld [vmem:[%s4 + $0x8] sm:$0xff]
    %v242 = vld [vmem:[%s4 + $0x10] sm:$0xff]
    %v243 = vld [vmem:[%s4 + $0x18] sm:$0xff]
    %245 = vset.pattern.permute.xlu0 0
    %246 = vperm.xlu0 %245, %v240
    %v247 = vpop.permute.xlu0 %246
    %250 = vset.pattern.permute.xlu0 0
    %251 = vperm.xlu0 %250, %v241
    %v252 = vpop.permute.xlu0 %251
    %255 = vset.pattern.permute.xlu0 0
    %256 = vperm.xlu0 %255, %v242
    %v257 = vpop.permute.xlu0 %256
    %260 = vset.pattern.permute.xlu0 0
    %261 = vperm.xlu0 %260, %v243
    %v262 = vpop.permute.xlu0 %261
    %vm264 = vcmask 261120
    %v266 = vsel %vm264, %v236, 0
    %v269 = vsel %vm264, %v237, 0
    %v272 = vsel %vm264, %v238, 0
    %v275 = vsel %vm264, %v239, 0
    %277 = vmatprep.subr.mxu0 0.0
    %278 = vmatpush1.msra.mxu0 0.0
    %279 = vmatprep.subr.mxu0 0.0
    %280 = vmatpush1.msra.mxu0 0.0
    %281 = vmatprep.subr.mxu0 0.0
    %282 = vmatpush1.msra.mxu0 0.0
    %283 = vmatprep.subr.mxu0 0.0
    %284 = vmatpush1.msra.mxu0 0.0
    %285 = vmatprep.subr.mxu0 0.0
    %286 = vmatpush1.msra.mxu0 0.0
    %287 = vmatprep.subr.mxu0 0.0
    %288 = vmatpush1.msra.mxu0 0.0
    %289 = vmatprep.subr.mxu0 0.0
    %290 = vmatpush1.msra.mxu0 0.0
    %291 = vmatprep.subr.mxu0 0.0
    %292 = vmatpush1.msra.mxu0 0.0
    %293 = vmatprep.subr.mxu0 0.0
    %294 = vmatpush1.msra.mxu0 0.0
    %295 = vmatprep.subr.mxu0 0.0
    %296 = vmatpush1.msra.mxu0 0.0
    %297 = vmatprep.subr.mxu0 0.0
    %298 = vmatpush1.msra.mxu0 0.0
    %299 = vmatprep.subr.mxu0 0.0
    %300 = vmatpush1.msra.mxu0 0.0
    %301 = vmatprep.subr.mxu0 0.0
    %302 = vmatpush1.msra.mxu0 %v235
    %303 = vmatprep.subr.mxu0 0.0
    %304 = vmatpush1.msra.mxu0 %v234
    %305 = vmatprep.subr.mxu0 0.0
    %306 = vmatpush1.msra.mxu0 %v233
    %307 = vmatprep.subr.mxu0 0.0
    %308 = vmatpush1.msra.mxu0 %v232
    %309 = vmatprep.subr.mxu0 0.0
    %310 = vmatpush2.msra.mxu0 0.0
    %311 = vmatprep.subr.mxu0 0.0
    %312 = vmatpush2.msra.mxu0 0.0
    %313 = vmatprep.subr.mxu0 0.0
    %314 = vmatpush2.msra.mxu0 0.0
    %315 = vmatprep.subr.mxu0 0.0
    %316 = vmatpush2.msra.mxu0 0.0
    %317 = vmatprep.subr.mxu0 0.0
    %318 = vmatpush2.msra.mxu0 0.0
    %319 = vmatprep.subr.mxu0 0.0
    %320 = vmatpush2.msra.mxu0 0.0
    %321 = vmatprep.subr.mxu0 0.0
    %322 = vmatpush2.msra.mxu0 0.0
    %323 = vmatprep.subr.mxu0 0.0
    %324 = vmatpush2.msra.mxu0 0.0
    %325 = vmatprep.subr.mxu0 0.0
    %326 = vmatpush2.msra.mxu0 0.0
    %327 = vmatprep.subr.mxu0 0.0
    %328 = vmatpush2.msra.mxu0 0.0
    %329 = vmatprep.subr.mxu0 0.0
    %330 = vmatpush2.msra.mxu0 0.0
    %331 = vmatprep.subr.mxu0 0.0
    %332 = vmatpush2.msra.mxu0 0.0
    %333 = vmatprep.subr.mxu0 0.0
    %334 = vmatpush2.msra.mxu0 0.0
    %335 = vmatprep.subr.mxu0 0.0
    %336 = vmatpush2.msra.mxu0 0.0
    %337 = vmatprep.subr.mxu0 0.0
    %338 = vmatpush2.msra.mxu0 0.0
    %339 = vmatprep.subr.mxu0 0.0
    %340 = vmatpush2.msra.mxu0 0.0
    %341 = vmatprep.mubr.f32.mxu0 0.0
    %342 = vmatmul.mubr.f32.gmra.mxu0 %v266
    %v343 = vpop.f32.mrf.mxu0
    %v344 = vadd.f32 %v247, %v343
    %v345 = vpop.f32.mrf.mxu0
    %346 = vmatprep.mubr.f32.mxu0 0.0
    %347 = vmatmul.mubr.f32.gmra.mxu0 %v269
    %v348 = vpop.f32.mrf.mxu0
    %v349 = vadd.f32 %v252, %v348
    %v350 = vpop.f32.mrf.mxu0
    %351 = vmatprep.mubr.f32.mxu0 0.0
    %352 = vmatmul.mubr.f32.gmra.mxu0 %v272
    %v353 = vpop.f32.mrf.mxu0
    %v354 = vadd.f32 %v257, %v353
    %v355 = vpop.f32.mrf.mxu0
    %356 = vmatprep.mubr.f32.mxu0 0.0
    %357 = vmatmul.mubr.f32.gmra.mxu0 %v275
    %v358 = vpop.f32.mrf.mxu0
    %v359 = vadd.f32 %v262, %v358
    %v360 = vpop.f32.mrf.mxu0
    %361 = vdwg.mxu0
    %v362 = vtanh.pop %v344
    %v363 = vtanh.pop %v349
    %v364 = vtanh.pop %v354
    %v365 = vtanh.pop %v359
    %v366 = vtanh.pop %v362
    %v367 = vtanh.pop %v363
    %v368 = vtanh.pop %v364
    %v369 = vtanh.pop %v365
    %v370 = vld [vmem:[%s5] sm:$0xff]
    %v371 = vld [vmem:[%s5 + $0x8] sm:$0xff]
    %v372 = vld [vmem:[%s5 + $0x10] sm:$0xff]
    %v373 = vld [vmem:[%s5 + $0x18] sm:$0xff]
    %v374 = vld [vmem:[%s6] sm:$0xff]
    %v375 = vld [vmem:[%s6 + $0x8] sm:$0xff]
    %v376 = vld [vmem:[%s6 + $0x10] sm:$0xff]
    %v377 = vld [vmem:[%s6 + $0x18] sm:$0xff]
    %379 = vset.pattern.permute.xlu0 0
    %380 = vperm.xlu0 %379, %v374
    %v381 = vpop.permute.xlu0 %380
    %384 = vset.pattern.permute.xlu0 0
    %385 = vperm.xlu0 %384, %v375
    %v386 = vpop.permute.xlu0 %385
    %389 = vset.pattern.permute.xlu0 0
    %390 = vperm.xlu0 %389, %v376
    %v391 = vpop.permute.xlu0 %390
    %394 = vset.pattern.permute.xlu0 0
    %395 = vperm.xlu0 %394, %v377
    %v396 = vpop.permute.xlu0 %395
    %v399 = vsel %vm264, %v370, 0
    %v402 = vsel %vm264, %v371, 0
    %v405 = vsel %vm264, %v372, 0
    %v408 = vsel %vm264, %v373, 0
    %410 = vmatprep.subr.mxu0 0.0
    %411 = vmatpush1.msra.mxu0 0.0
    %412 = vmatprep.subr.mxu0 0.0
    %413 = vmatpush1.msra.mxu0 0.0
    %414 = vmatprep.subr.mxu0 0.0
    %415 = vmatpush1.msra.mxu0 0.0
    %416 = vmatprep.subr.mxu0 0.0
    %417 = vmatpush1.msra.mxu0 0.0
    %418 = vmatprep.subr.mxu0 0.0
    %419 = vmatpush1.msra.mxu0 0.0
    %420 = vmatprep.subr.mxu0 0.0
    %421 = vmatpush1.msra.mxu0 0.0
    %422 = vmatprep.subr.mxu0 0.0
    %423 = vmatpush1.msra.mxu0 0.0
    %424 = vmatprep.subr.mxu0 0.0
    %425 = vmatpush1.msra.mxu0 0.0
    %426 = vmatprep.subr.mxu0 0.0
    %427 = vmatpush1.msra.mxu0 0.0
    %428 = vmatprep.subr.mxu0 0.0
    %429 = vmatpush1.msra.mxu0 0.0
    %430 = vmatprep.subr.mxu0 0.0
    %431 = vmatpush1.msra.mxu0 0.0
    %432 = vmatprep.subr.mxu0 0.0
    %433 = vmatpush1.msra.mxu0 0.0
    %434 = vmatprep.subr.mxu0 0.0
    %435 = vmatpush1.msra.mxu0 %v369
    %436 = vmatprep.subr.mxu0 0.0
    %437 = vmatpush1.msra.mxu0 %v368
    %438 = vmatprep.subr.mxu0 0.0
    %439 = vmatpush1.msra.mxu0 %v367
    %440 = vmatprep.subr.mxu0 0.0
    %441 = vmatpush1.msra.mxu0 %v366
    %442 = vmatprep.subr.mxu0 0.0
    %443 = vmatpush2.msra.mxu0 0.0
    %444 = vmatprep.subr.mxu0 0.0
    %445 = vmatpush2.msra.mxu0 0.0
    %446 = vmatprep.subr.mxu0 0.0
    %447 = vmatpush2.msra.mxu0 0.0
    %448 = vmatprep.subr.mxu0 0.0
    %449 = vmatpush2.msra.mxu0 0.0
    %450 = vmatprep.subr.mxu0 0.0
    %451 = vmatpush2.msra.mxu0 0.0
    %452 = vmatprep.subr.mxu0 0.0
    %453 = vmatpush2.msra.mxu0 0.0
    %454 = vmatprep.subr.mxu0 0.0
    %455 = vmatpush2.msra.mxu0 0.0
    %456 = vmatprep.subr.mxu0 0.0
    %457 = vmatpush2.msra.mxu0 0.0
    %458 = vmatprep.subr.mxu0 0.0
    %459 = vmatpush2.msra.mxu0 0.0
    %460 = vmatprep.subr.mxu0 0.0
    %461 = vmatpush2.msra.mxu0 0.0
    %462 = vmatprep.subr.mxu0 0.0
    %463 = vmatpush2.msra.mxu0 0.0
    %464 = vmatprep.subr.mxu0 0.0
    %465 = vmatpush2.msra.mxu0 0.0
    %466 = vmatprep.subr.mxu0 0.0
    %467 = vmatpush2.msra.mxu0 0.0
    %468 = vmatprep.subr.mxu0 0.0
    %469 = vmatpush2.msra.mxu0 0.0
    %470 = vmatprep.subr.mxu0 0.0
    %471 = vmatpush2.msra.mxu0 0.0
    %472 = vmatprep.subr.mxu0 0.0
    %473 = vmatpush2.msra.mxu0 0.0
    %474 = vmatprep.mubr.f32.mxu0 0.0
    %475 = vmatmul.mubr.f32.gmra.mxu0 %v399
    %v476 = vpop.f32.mrf.mxu0
    %v477 = vadd.f32 %v381, %v476
    %v478 = vpop.f32.mrf.mxu0
    %479 = vmatprep.mubr.f32.mxu0 0.0
    %480 = vmatmul.mubr.f32.gmra.mxu0 %v402
    %v481 = vpop.f32.mrf.mxu0
    %v482 = vadd.f32 %v386, %v481
    %v483 = vpop.f32.mrf.mxu0
    %484 = vmatprep.mubr.f32.mxu0 0.0
    %485 = vmatmul.mubr.f32.gmra.mxu0 %v405
    %v486 = vpop.f32.mrf.mxu0
    %v487 = vadd.f32 %v391, %v486
    %v488 = vpop.f32.mrf.mxu0
    %489 = vmatprep.mubr.f32.mxu0 0.0
    %490 = vmatmul.mubr.f32.gmra.mxu0 %v408
    %v491 = vpop.f32.mrf.mxu0
    %v492 = vadd.f32 %v396, %v491
    %v493 = vpop.f32.mrf.mxu0
    %494 = vdwg.mxu0
    %v495 = vtanh.pop %v477
    %v496 = vtanh.pop %v482
    %v497 = vtanh.pop %v487
    %v498 = vtanh.pop %v492
    %v499 = vld [vmem:[%s7] sm:$0xff]
    %v500 = vld [vmem:[%s7 + $0x8] sm:$0xff]
    %v501 = vld [vmem:[%s7 + $0x10] sm:$0xff]
    %v502 = vld [vmem:[%s7 + $0x18] sm:$0xff]
    %v503 = vld [vmem:[%s8] sm:$0xff]
    %v504 = vld [vmem:[%s8 + $0x8] sm:$0xff]
    %v505 = vld [vmem:[%s8 + $0x10] sm:$0xff]
    %v506 = vld [vmem:[%s8 + $0x18] sm:$0xff]
    %508 = vset.pattern.permute.xlu0 0
    %509 = vperm.xlu0 %508, %v503
    %v510 = vpop.permute.xlu0 %509
    %513 = vset.pattern.permute.xlu0 0
    %514 = vperm.xlu0 %513, %v504
    %v515 = vpop.permute.xlu0 %514
    %518 = vset.pattern.permute.xlu0 0
    %519 = vperm.xlu0 %518, %v505
    %v520 = vpop.permute.xlu0 %519
    %523 = vset.pattern.permute.xlu0 0
    %524 = vperm.xlu0 %523, %v506
    %v525 = vpop.permute.xlu0 %524
    %v528 = vsel %vm264, %v499, 0
    %v531 = vsel %vm264, %v500, 0
    %v534 = vsel %vm264, %v501, 0
    %v537 = vsel %vm264, %v502, 0
    %539 = vmatprep.subr.mxu0 0.0
    %540 = vmatpush1.msra.mxu0 0.0
    %541 = vmatprep.subr.mxu0 0.0
    %542 = vmatpush1.msra.mxu0 0.0
    %543 = vmatprep.subr.mxu0 0.0
    %544 = vmatpush1.msra.mxu0 0.0
    %545 = vmatprep.subr.mxu0 0.0
    %546 = vmatpush1.msra.mxu0 0.0
    %547 = vmatprep.subr.mxu0 0.0
    %548 = vmatpush1.msra.mxu0 0.0
    %549 = vmatprep.subr.mxu0 0.0
    %550 = vmatpush1.msra.mxu0 0.0
    %551 = vmatprep.subr.mxu0 0.0
    %552 = vmatpush1.msra.mxu0 0.0
    %553 = vmatprep.subr.mxu0 0.0
    %554 = vmatpush1.msra.mxu0 0.0
    %555 = vmatprep.subr.mxu0 0.0
    %556 = vmatpush1.msra.mxu0 0.0
    %557 = vmatprep.subr.mxu0 0.0
    %558 = vmatpush1.msra.mxu0 0.0
    %559 = vmatprep.subr.mxu0 0.0
    %560 = vmatpush1.msra.mxu0 0.0
    %561 = vmatprep.subr.mxu0 0.0
    %562 = vmatpush1.msra.mxu0 0.0
    %563 = vmatprep.subr.mxu0 0.0
    %564 = vmatpush1.msra.mxu0 %v498
    %565 = vmatprep.subr.mxu0 0.0
    %566 = vmatpush1.msra.mxu0 %v497
    %567 = vmatprep.subr.mxu0 0.0
    %568 = vmatpush1.msra.mxu0 %v496
    %569 = vmatprep.subr.mxu0 0.0
    %570 = vmatpush1.msra.mxu0 %v495
    %571 = vmatprep.subr.mxu0 0.0
    %572 = vmatpush2.msra.mxu0 0.0
    %573 = vmatprep.subr.mxu0 0.0
    %574 = vmatpush2.msra.mxu0 0.0
    %575 = vmatprep.subr.mxu0 0.0
    %576 = vmatpush2.msra.mxu0 0.0
    %577 = vmatprep.subr.mxu0 0.0
    %578 = vmatpush2.msra.mxu0 0.0
    %579 = vmatprep.subr.mxu0 0.0
    %580 = vmatpush2.msra.mxu0 0.0
    %581 = vmatprep.subr.mxu0 0.0
    %582 = vmatpush2.msra.mxu0 0.0
    %583 = vmatprep.subr.mxu0 0.0
    %584 = vmatpush2.msra.mxu0 0.0
    %585 = vmatprep.subr.mxu0 0.0
    %586 = vmatpush2.msra.mxu0 0.0
    %587 = vmatprep.subr.mxu0 0.0
    %588 = vmatpush2.msra.mxu0 0.0
    %589 = vmatprep.subr.mxu0 0.0
    %590 = vmatpush2.msra.mxu0 0.0
    %591 = vmatprep.subr.mxu0 0.0
    %592 = vmatpush2.msra.mxu0 0.0
    %593 = vmatprep.subr.mxu0 0.0
    %594 = vmatpush2.msra.mxu0 0.0
    %595 = vmatprep.subr.mxu0 0.0
    %596 = vmatpush2.msra.mxu0 0.0
    %597 = vmatprep.subr.mxu0 0.0
    %598 = vmatpush2.msra.mxu0 0.0
    %599 = vmatprep.subr.mxu0 0.0
    %600 = vmatpush2.msra.mxu0 0.0
    %601 = vmatprep.subr.mxu0 0.0
    %602 = vmatpush2.msra.mxu0 0.0
    %603 = vmatprep.mubr.f32.mxu0 0.0
    %604 = vmatmul.mubr.f32.gmra.mxu0 %v528
    %v605 = vpop.f32.mrf.mxu0
    %v606 = vadd.f32 %v510, %v605
    %v607 = vpop.f32.mrf.mxu0
    %608 = vmatprep.mubr.f32.mxu0 0.0
    %609 = vmatmul.mubr.f32.gmra.mxu0 %v531
    %v610 = vpop.f32.mrf.mxu0
    %v611 = vadd.f32 %v515, %v610
    %v612 = vpop.f32.mrf.mxu0
    %613 = vmatprep.mubr.f32.mxu0 0.0
    %614 = vmatmul.mubr.f32.gmra.mxu0 %v534
    %v615 = vpop.f32.mrf.mxu0
    %v616 = vadd.f32 %v520, %v615
    %v617 = vpop.f32.mrf.mxu0
    %618 = vmatprep.mubr.f32.mxu0 0.0
    %619 = vmatmul.mubr.f32.gmra.mxu0 %v537
    %v620 = vpop.f32.mrf.mxu0
    %v621 = vadd.f32 %v525, %v620
    %v622 = vpop.f32.mrf.mxu0
    %623 = vdwg.mxu0
    %v624 = vtanh.pop %v606
    %v625 = vtanh.pop %v611
    %v626 = vtanh.pop %v616
    %v627 = vtanh.pop %v621
    %v628 = vld [vmem:[%s9] sm:$0xff]
    %v629 = vld [vmem:[%s9 + $0x8] sm:$0xff]
    %v630 = vld [vmem:[%s9 + $0x10] sm:$0xff]
    %v631 = vld [vmem:[%s9 + $0x18] sm:$0xff]
    %v632 = vld [vmem:[%s10] sm:$0xff]
    %v633 = vld [vmem:[%s10 + $0x8] sm:$0xff]
    %v634 = vld [vmem:[%s10 + $0x10] sm:$0xff]
    %v635 = vld [vmem:[%s10 + $0x18] sm:$0xff]
    %637 = vset.pattern.permute.xlu0 0
    %638 = vperm.xlu0 %637, %v632
    %v639 = vpop.permute.xlu0 %638
    %642 = vset.pattern.permute.xlu0 0
    %643 = vperm.xlu0 %642, %v633
    %v644 = vpop.permute.xlu0 %643
    %647 = vset.pattern.permute.xlu0 0
    %648 = vperm.xlu0 %647, %v634
    %v649 = vpop.permute.xlu0 %648
    %652 = vset.pattern.permute.xlu0 0
    %653 = vperm.xlu0 %652, %v635
    %v654 = vpop.permute.xlu0 %653
    %v657 = vsel %vm264, %v628, 0
    %v660 = vsel %vm264, %v629, 0
    %v663 = vsel %vm264, %v630, 0
    %v666 = vsel %vm264, %v631, 0
    %668 = vmatprep.subr.mxu0 0.0
    %669 = vmatpush1.msra.mxu0 0.0
    %670 = vmatprep.subr.mxu0 0.0
    %671 = vmatpush1.msra.mxu0 0.0
    %672 = vmatprep.subr.mxu0 0.0
    %673 = vmatpush1.msra.mxu0 0.0
    %674 = vmatprep.subr.mxu0 0.0
    %675 = vmatpush1.msra.mxu0 0.0
    %676 = vmatprep.subr.mxu0 0.0
    %677 = vmatpush1.msra.mxu0 0.0
    %678 = vmatprep.subr.mxu0 0.0
    %679 = vmatpush1.msra.mxu0 0.0
    %680 = vmatprep.subr.mxu0 0.0
    %681 = vmatpush1.msra.mxu0 0.0
    %682 = vmatprep.subr.mxu0 0.0
    %683 = vmatpush1.msra.mxu0 0.0
    %684 = vmatprep.subr.mxu0 0.0
    %685 = vmatpush1.msra.mxu0 0.0
    %686 = vmatprep.subr.mxu0 0.0
    %687 = vmatpush1.msra.mxu0 0.0
    %688 = vmatprep.subr.mxu0 0.0
    %689 = vmatpush1.msra.mxu0 0.0
    %690 = vmatprep.subr.mxu0 0.0
    %691 = vmatpush1.msra.mxu0 0.0
    %692 = vmatprep.subr.mxu0 0.0
    %693 = vmatpush1.msra.mxu0 %v627
    %694 = vmatprep.subr.mxu0 0.0
    %695 = vmatpush1.msra.mxu0 %v626
    %696 = vmatprep.subr.mxu0 0.0
    %697 = vmatpush1.msra.mxu0 %v625
    %698 = vmatprep.subr.mxu0 0.0
    %699 = vmatpush1.msra.mxu0 %v624
    %700 = vmatprep.subr.mxu0 0.0
    %701 = vmatpush2.msra.mxu0 0.0
    %702 = vmatprep.subr.mxu0 0.0
    %703 = vmatpush2.msra.mxu0 0.0
    %704 = vmatprep.subr.mxu0 0.0
    %705 = vmatpush2.msra.mxu0 0.0
    %706 = vmatprep.subr.mxu0 0.0
    %707 = vmatpush2.msra.mxu0 0.0
    %708 = vmatprep.subr.mxu0 0.0
    %709 = vmatpush2.msra.mxu0 0.0
    %710 = vmatprep.subr.mxu0 0.0
    %711 = vmatpush2.msra.mxu0 0.0
    %712 = vmatprep.subr.mxu0 0.0
    %713 = vmatpush2.msra.mxu0 0.0
    %714 = vmatprep.subr.mxu0 0.0
    %715 = vmatpush2.msra.mxu0 0.0
    %716 = vmatprep.subr.mxu0 0.0
    %717 = vmatpush2.msra.mxu0 0.0
    %718 = vmatprep.subr.mxu0 0.0
    %719 = vmatpush2.msra.mxu0 0.0
    %720 = vmatprep.subr.mxu0 0.0
    %721 = vmatpush2.msra.mxu0 0.0
    %722 = vmatprep.subr.mxu0 0.0
    %723 = vmatpush2.msra.mxu0 0.0
    %724 = vmatprep.subr.mxu0 0.0
    %725 = vmatpush2.msra.mxu0 0.0
    %726 = vmatprep.subr.mxu0 0.0
    %727 = vmatpush2.msra.mxu0 0.0
    %728 = vmatprep.subr.mxu0 0.0
    %729 = vmatpush2.msra.mxu0 0.0
    %730 = vmatprep.subr.mxu0 0.0
    %731 = vmatpush2.msra.mxu0 0.0
    %732 = vmatprep.mubr.f32.mxu0 0.0
    %733 = vmatmul.mubr.f32.gmra.mxu0 %v657
    %v734 = vpop.f32.mrf.mxu0
    %v735 = vadd.f32 %v639, %v734
    %v736 = vpop.f32.mrf.mxu0
    %737 = vmatprep.mubr.f32.mxu0 0.0
    %738 = vmatmul.mubr.f32.gmra.mxu0 %v660
    %v739 = vpop.f32.mrf.mxu0
    %v740 = vadd.f32 %v644, %v739
    %v741 = vpop.f32.mrf.mxu0
    %742 = vmatprep.mubr.f32.mxu0 0.0
    %743 = vmatmul.mubr.f32.gmra.mxu0 %v663
    %v744 = vpop.f32.mrf.mxu0
    %v745 = vadd.f32 %v649, %v744
    %v746 = vpop.f32.mrf.mxu0
    %747 = vmatprep.mubr.f32.mxu0 0.0
    %748 = vmatmul.mubr.f32.gmra.mxu0 %v666
    %v749 = vpop.f32.mrf.mxu0
    %v750 = vadd.f32 %v654, %v749
    %v751 = vpop.f32.mrf.mxu0
    %752 = vdwg.mxu0
    %v753 = vtanh.pop %v735
    %v754 = vtanh.pop %v740
    %v755 = vtanh.pop %v745
    %v756 = vtanh.pop %v750
    %v757 = vld [vmem:[%s11] sm:$0xff]
    %v758 = vld [vmem:[%s11 + $0x8] sm:$0xff]
    %v759 = vld [vmem:[%s11 + $0x10] sm:$0xff]
    %v760 = vld [vmem:[%s11 + $0x18] sm:$0xff]
    %762 = vset.pattern.permute.xlu0 0
    %763 = vperm.xlu0 %762, %v757
    %v764 = vpop.permute.xlu0 %763
    %767 = vset.pattern.permute.xlu0 0
    %768 = vperm.xlu0 %767, %v758
    %v769 = vpop.permute.xlu0 %768
    %772 = vset.pattern.permute.xlu0 0
    %773 = vperm.xlu0 %772, %v759
    %v774 = vpop.permute.xlu0 %773
    %777 = vset.pattern.permute.xlu0 0
    %778 = vperm.xlu0 %777, %v760
    %v779 = vpop.permute.xlu0 %778
    %v781 = vmul.f32 %v753, %v764
    %v782 = vmul.f32 %v754, %v769
    %v783 = vmul.f32 %v755, %v774
    %v784 = vmul.f32 %v756, %v779
    %v785 = vadd.f32 %v781, %v782
    %v786 = vadd.f32 %v785, %v783
    %v787 = vadd.f32 %v786, %v784
    %v788 = vrot.slane %v787, 4
    %v789 = vadd.f32 %v787, %v788
    %v790 = vrot.slane %v789, 2
    %v791 = vadd.f32 %v789, %v790
    %v792 = vrot.slane %v791, 1
    %v793 = vadd.f32 %v791, %v792
    %794 = vst [vmem:[#allocation2] sm:$0x1] %v793
    // Predicated region
    $region50: #{tpu_custom_call.1} parent=1 // pred_check
      _
    $region51: #{tpu_custom_call.1} parent=1 // pred_check_branch
      %796 = sbr.rel (0) target = $region53
    $region52: #{tpu_custom_call.1} parent=1 // pred_region
      %s798 = ssub.s32 16, 16
      %799 = vsyncadd [#allocation3], %s798
      %s801 = sshll.u32 [#allocation2], 4
      %s802 = int_to_ptr.vmem [resolvable:$true] %s801
      %804 = dma.vmem_to_hbm [thread:$0]  %s802, 16, %s12, [#allocation3]
    $region53: #{tpu_custom_call.1} parent=1 // pred_fallthru
      _
    // Predicated region
    $region54: #{tpu_custom_call.1} parent=1 // pred_check
      _
    $region55: #{tpu_custom_call.1} parent=1 // pred_check_branch
      %806 = sbr.rel (0) target = $region57
    $region56: #{tpu_custom_call.1} parent=1 // pred_region
      %807 = dma.done [#allocation3], 16
    $region57: #{tpu_custom_call.1} parent=1 // pred_fallthru
      _
    %808 = vsyncpa [#allocation3], 1

</llo_original>
